<compile_context>
chip_gen: v6e
topology: v6e:2x2x1
jax: 0.10.0
libtpu: 0.0.40
codegen_flags: <defaults>
</compile_context>

<pallas_src>
import functools

import jax
import jax.numpy as jnp
from jax.experimental import pallas as pl
from jax.experimental.pallas import tpu as pltpu

_LANE = 512  # lane-dense last dim (multiple of 128)


def _cdiv(a, b):
    return (a + b - 1) // b


def _round_up(a, b):
    return _cdiv(a, b) * b


def _make_kernel(sigma, box_dim):
    """Bake static sigma-derived constants into the kernel body."""
    sigma2 = float(sigma) ** 2
    thresh = 1.0 / sigma2
    half_sigma2 = 0.5 * sigma2
    lin_offset = 0.5 / sigma2
    inv_d = 1.0 / float(box_dim)

    def kernel(pred_ref, gt_ref, lbl_ref, loss_out_ref, cnt_out_ref,
               loss_acc, cnt_acc):
        k = pl.program_id(1)  # inner (reduction) axis within this chunk

        @pl.when(k == 0)
        def _():
            loss_acc[...] = jnp.zeros_like(loss_acc)
            cnt_acc[...] = jnp.zeros_like(cnt_acc)

        pred = pred_ref[...].astype(jnp.float32)
        gt = gt_ref[...].astype(jnp.float32)
        lbl = lbl_ref[...]                       # int32, -1 on padding

        # in_weight == 1 where label > 0 (foreground); otherwise diff is zeroed.
        diff = jnp.where(lbl > 0, pred - gt, 0.0)
        abs_diff = jnp.abs(diff)
        y = jnp.where(abs_diff < thresh,
                      half_sigma2 * diff * diff,
                      abs_diff - lin_offset)

        # Pure element-wise accumulation (VPU only); reduce once in epilogue.
        loss_acc[...] += y
        cnt_acc[...] += jnp.where(lbl >= 0, 1.0, 0.0)

        @pl.when(k == pl.num_programs(1) - 1)
        def _():
            loss_sum = jnp.sum(loss_acc[...])
            cnt_sum = jnp.sum(cnt_acc[...]) * inv_d  # labels were expanded D-fold
            loss_out_ref[...] = jnp.full(loss_out_ref.shape, loss_sum, jnp.float32)
            cnt_out_ref[...] = jnp.full(cnt_out_ref.shape, cnt_sum, jnp.float32)

    return kernel


@functools.partial(jax.jit, static_argnames=("sigma", "tile_rows", "num_chunks"))
def smooth_l1_loss(pred_locs, gt_locs, gt_labels, sigma, tile_rows=512,
                   num_chunks=2):
    d = pred_locs.shape[-1]
    m = gt_labels.size
    n = m * d

    # Flatten lane-dense; keep native dtype (bf16 inputs stay bf16 in HBM).
    pred = pred_locs.reshape(-1)
    gt = gt_locs.reshape(-1)
    lbl = jnp.broadcast_to(
        gt_labels.reshape(-1, 1).astype(jnp.int32), (m, d)).reshape(-1)

    # Choose a row tile: up to `tile_rows` rows of 512 lanes, multiple of 8,
    # shrunk for tiny inputs so we don't over-pad.
    rows = _cdiv(n, _LANE)
    tr = max(8, min(tile_rows, _round_up(_cdiv(rows, num_chunks), 8)))
    steps = _cdiv(rows, num_chunks * tr)      # inner (reduction) grid extent
    rows_padded = num_chunks * steps * tr
    n_padded = rows_padded * _LANE

    if n_padded != n:  # only pad the ragged tail case; aligned inputs copy-free
        pad = n_padded - n
        pred = jnp.pad(pred, (0, pad))
        gt = jnp.pad(gt, (0, pad))
        lbl = jnp.pad(lbl, (0, pad), constant_values=-1)  # ignored rows

    pred = pred.reshape(rows_padded, _LANE)
    gt = gt.reshape(rows_padded, _LANE)
    lbl = lbl.reshape(rows_padded, _LANE)

    def data_index_map(c, k):
        return (c * steps + k, 0)

    data_spec_pred = pl.BlockSpec((tr, _LANE), data_index_map)
    data_spec_gt = pl.BlockSpec((tr, _LANE), data_index_map)
    data_spec_lbl = pl.BlockSpec((tr, _LANE), data_index_map)
    out_spec = pl.BlockSpec((1, 8, 128), lambda c, k: (c, 0, 0))

    kernel = _make_kernel(sigma, d)

    loss_parts, cnt_parts = pl.pallas_call(
        kernel,
        out_shape=(jax.ShapeDtypeStruct((num_chunks, 8, 128), jnp.float32),
                   jax.ShapeDtypeStruct((num_chunks, 8, 128), jnp.float32)),
        grid=(num_chunks, steps),
        in_specs=[data_spec_pred, data_spec_gt, data_spec_lbl],
        out_specs=(out_spec, out_spec),
        scratch_shapes=[
            pltpu.VMEM((tr, _LANE), jnp.float32),   # running per-element loss
            pltpu.VMEM((tr, _LANE), jnp.float32),   # running per-element count
        ],
        compiler_params=pltpu.CompilerParams(
            dimension_semantics=("parallel", "arbitrary")),
    )(pred, gt, lbl)

    loss_sum = jnp.sum(loss_parts[:, 0, 0])
    count = jnp.sum(cnt_parts[:, 0, 0])
    return loss_sum / jnp.maximum(count, 1e-9)


def _reference(pred_locs, gt_locs, gt_labels, sigma):
    """Pure-JAX replica of the PyTorch forward, for verification."""
    d = pred_locs.shape[-1]
    x = pred_locs.reshape(-1, d).astype(jnp.float32)
    t = gt_locs.reshape(-1, d).astype(jnp.float32)
    lbl = gt_labels.reshape(-1, 1).astype(jnp.float32)
    in_w = jnp.where(lbl > 0.0, 1.0, 0.0)
    sigma2 = sigma ** 2
    diff = in_w * (x - t)
    abs_diff = jnp.abs(diff)
    flag = (abs_diff < 1.0 / sigma2).astype(jnp.float32)
    y = flag * (sigma2 / 2.0) * diff ** 2 + (1.0 - flag) * (abs_diff - 0.5 / sigma2)
    loss = jnp.sum(y)
    cnt = jnp.maximum(jnp.sum((lbl >= 0.0).astype(jnp.float32)), 1e-9)
    return loss / cnt


if __name__ == "__main__":
    key = jax.random.PRNGKey(0)
    k1, k2, k3 = jax.random.split(key, 3)

    B, A, D = 2, 13, 4          # batch, anchors, box-coord dim (odd A -> ragged tail)
    sigma = 3.0

    pred_locs = jax.random.normal(k1, (B, A, D), dtype=jnp.float32)
    gt_locs = jax.random.normal(k2, (B, A, D), dtype=jnp.float32)
    # labels in {-1, 0, 1, 2}: -1 = ignore, 0 = background, >0 = foreground
    gt_labels = jax.random.randint(k3, (B, A), -1, 3, dtype=jnp.int32)

    loss = smooth_l1_loss(pred_locs, gt_locs, gt_labels, sigma=sigma)
    loss = jax.block_until_ready(loss)

    ref = jax.block_until_ready(_reference(pred_locs, gt_locs, gt_labels, sigma))
    assert jnp.allclose(loss, ref, rtol=1e-5, atol=1e-6), (loss, ref)

    print("KERNEL_OK")
</pallas_src>

<mosaic_0001>
module attributes {stable_mosaic.version = 11 : i64} {
  func.func @kernel(%arg0: i32, %arg1: i32, %arg2: memref<8x512xf32, #tpu.memory_space<vmem>>, %arg3: memref<8x512xf32, #tpu.memory_space<vmem>>, %arg4: memref<8x512xi32, #tpu.memory_space<vmem>>, %arg5: memref<1x8x128xf32, #tpu.memory_space<vmem>>, %arg6: memref<1x8x128xf32, #tpu.memory_space<vmem>>, %arg7: memref<8x512xf32, #tpu.memory_space<vmem>>, %arg8: memref<8x512xf32, #tpu.memory_space<vmem>>) attributes {dimension_semantics = [#tpu.dimension_semantics<parallel>, #tpu.dimension_semantics<arbitrary>], iteration_bounds = array<i64: 2, 1>, scalar_prefetch = 0 : i64, scratch_operands = 2 : i64, tpu.core_type = #tpu.core_type<tc>, window_params = [{transform_indices = @transform_0, window_bounds = array<i64: 8, 512>}, {transform_indices = @transform_1, window_bounds = array<i64: 8, 512>}, {transform_indices = @transform_2, window_bounds = array<i64: 8, 512>}, {transform_indices = @transform_3, window_bounds = array<i64: 1, 8, 128>}, {transform_indices = @transform_4, window_bounds = array<i64: 1, 8, 128>}]} {
    %c0_i32 = arith.constant 0 : i32
    %0 = arith.cmpi eq, %arg1, %c0_i32 : i32
    %1 = arith.extui %0 : i1 to i32
    %c0_i32_0 = arith.constant 0 : i32
    %2 = arith.cmpi ne, %1, %c0_i32_0 : i32
    scf.if %2 {
      %cst_23 = arith.constant 0.000000e+00 : f32
      %34 = vector.broadcast %cst_23 : f32 to vector<8x512xf32>
      %c0_24 = arith.constant 0 : index
      %c0_25 = arith.constant 0 : index
      %35 = vector.load %arg7[%c0_24, %c0_25] : memref<8x512xf32, #tpu.memory_space<vmem>>, vector<8x512xf32>
      tpu.vector_store %arg7[%c0_24, %c0_25], %34 {strides = array<i32>} : memref<8x512xf32, #tpu.memory_space<vmem>>, vector<8x512xf32>,
      %cst_26 = arith.constant 0.000000e+00 : f32
      %36 = vector.broadcast %cst_26 : f32 to vector<8x512xf32>
      %c0_27 = arith.constant 0 : index
      %c0_28 = arith.constant 0 : index
      %37 = vector.load %arg8[%c0_27, %c0_28] : memref<8x512xf32, #tpu.memory_space<vmem>>, vector<8x512xf32>
      tpu.vector_store %arg8[%c0_27, %c0_28], %36 {strides = array<i32>} : memref<8x512xf32, #tpu.memory_space<vmem>>, vector<8x512xf32>,
    } else {
    }
    %c0 = arith.constant 0 : index
    %c0_1 = arith.constant 0 : index
    %3 = vector.load %arg2[%c0, %c0_1] : memref<8x512xf32, #tpu.memory_space<vmem>>, vector<8x512xf32>
    %c0_2 = arith.constant 0 : index
    %c0_3 = arith.constant 0 : index
    %4 = vector.load %arg3[%c0_2, %c0_3] : memref<8x512xf32, #tpu.memory_space<vmem>>, vector<8x512xf32>
    %c0_4 = arith.constant 0 : index
    %c0_5 = arith.constant 0 : index
    %5 = vector.load %arg4[%c0_4, %c0_5] : memref<8x512xi32, #tpu.memory_space<vmem>>, vector<8x512xi32>
    %c0_i32_6 = arith.constant 0 : i32
    %6 = vector.broadcast %c0_i32_6 : i32 to vector<8x512xi32>
    %7 = arith.cmpi sgt, %5, %6 : vector<8x512xi32>
    %8 = arith.subf %3, %4 : vector<8x512xf32>
    %cst = arith.constant 0.000000e+00 : f32
    %9 = vector.broadcast %cst : f32 to vector<8x512xf32>
    %10 = arith.select %7, %8, %9 : vector<8x512xi1>, vector<8x512xf32>
    %11 = math.absf %10 : vector<8x512xf32>
    %cst_7 = arith.constant 0.111111112 : f32
    %12 = vector.broadcast %cst_7 : f32 to vector<8x512xf32>
    %13 = arith.cmpf olt, %11, %12 : vector<8x512xf32>
    %cst_8 = arith.constant 4.500000e+00 : f32
    %14 = vector.broadcast %cst_8 : f32 to vector<8x512xf32>
    %15 = arith.mulf %14, %10 : vector<8x512xf32>
    %16 = arith.mulf %15, %10 : vector<8x512xf32>
    %cst_9 = arith.constant 0.055555556 : f32
    %17 = vector.broadcast %cst_9 : f32 to vector<8x512xf32>
    %18 = arith.subf %11, %17 : vector<8x512xf32>
    %19 = arith.select %13, %16, %18 : vector<8x512xi1>, vector<8x512xf32>
    %c0_10 = arith.constant 0 : index
    %c0_11 = arith.constant 0 : index
    %20 = vector.load %arg7[%c0_10, %c0_11] : memref<8x512xf32, #tpu.memory_space<vmem>>, vector<8x512xf32>
    %21 = arith.addf %20, %19 : vector<8x512xf32>
    %c0_12 = arith.constant 0 : index
    %c0_13 = arith.constant 0 : index
    %22 = vector.load %arg7[%c0_12, %c0_13] : memref<8x512xf32, #tpu.memory_space<vmem>>, vector<8x512xf32>
    tpu.vector_store %arg7[%c0_12, %c0_13], %21 {strides = array<i32>} : memref<8x512xf32, #tpu.memory_space<vmem>>, vector<8x512xf32>,
    %c0_14 = arith.constant 0 : index
    %c0_15 = arith.constant 0 : index
    %23 = vector.load %arg8[%c0_14, %c0_15] : memref<8x512xf32, #tpu.memory_space<vmem>>, vector<8x512xf32>
    %c0_i32_16 = arith.constant 0 : i32
    %24 = vector.broadcast %c0_i32_16 : i32 to vector<8x512xi32>
    %25 = arith.cmpi sge, %5, %24 : vector<8x512xi32>
    %cst_17 = arith.constant 1.000000e+00 : f32
    %cst_18 = arith.constant 0.000000e+00 : f32
    %26 = vector.broadcast %cst_17 : f32 to vector<8x512xf32>
    %27 = vector.broadcast %cst_18 : f32 to vector<8x512xf32>
    %28 = arith.select %25, %26, %27 : vector<8x512xi1>, vector<8x512xf32>
    %29 = arith.addf %23, %28 : vector<8x512xf32>
    %c0_19 = arith.constant 0 : index
    %c0_20 = arith.constant 0 : index
    %30 = vector.load %arg8[%c0_19, %c0_20] : memref<8x512xf32, #tpu.memory_space<vmem>>, vector<8x512xf32>
    tpu.vector_store %arg8[%c0_19, %c0_20], %29 {strides = array<i32>} : memref<8x512xf32, #tpu.memory_space<vmem>>, vector<8x512xf32>,
    %c0_i32_21 = arith.constant 0 : i32
    %31 = arith.cmpi eq, %arg1, %c0_i32_21 : i32
    %32 = arith.extui %31 : i1 to i32
    %c0_i32_22 = arith.constant 0 : i32
    %33 = arith.cmpi ne, %32, %c0_i32_22 : i32
    scf.if %33 {
      %c0_23 = arith.constant 0 : index
      %c0_24 = arith.constant 0 : index
      %34 = vector.load %arg7[%c0_23, %c0_24] : memref<8x512xf32, #tpu.memory_space<vmem>>, vector<8x512xf32>
      %35 = vector.shape_cast %34 : vector<8x512xf32> to vector<1x8x512xf32>
      %cst_25 = arith.constant dense<0.000000e+00> : vector<1xf32>
      %36 = vector.multi_reduction <add>, %35, %cst_25 [1, 2] : vector<1x8x512xf32> to vector<1xf32>
      %37 = vector.shape_cast %36 : vector<1xf32> to vector<1x1x1xf32>
      %38 = vector.extract %37[0, 0, 0] : f32 from vector<1x1x1xf32>
      %c0_26 = arith.constant 0 : index
      %c0_27 = arith.constant 0 : index
      %39 = vector.load %arg8[%c0_26, %c0_27] : memref<8x512xf32, #tpu.memory_space<vmem>>, vector<8x512xf32>
      %40 = vector.shape_cast %39 : vector<8x512xf32> to vector<1x8x512xf32>
      %cst_28 = arith.constant dense<0.000000e+00> : vector<1xf32>
      %41 = vector.multi_reduction <add>, %40, %cst_28 [1, 2] : vector<1x8x512xf32> to vector<1xf32>
      %42 = vector.shape_cast %41 : vector<1xf32> to vector<1x1x1xf32>
      %43 = vector.extract %42[0, 0, 0] : f32 from vector<1x1x1xf32>
      %cst_29 = arith.constant 2.500000e-01 : f32
      %44 = arith.mulf %43, %cst_29 : f32
      %45 = vector.broadcast %38 : f32 to vector<1x8x128xf32>
      %c0_30 = arith.constant 0 : index
      %c0_31 = arith.constant 0 : index
      %c0_32 = arith.constant 0 : index
      %46 = vector.load %arg5[%c0_30, %c0_31, %c0_32] : memref<1x8x128xf32, #tpu.memory_space<vmem>>, vector<1x8x128xf32>
      tpu.vector_store %arg5[%c0_30, %c0_31, %c0_32], %45 {strides = array<i32>} : memref<1x8x128xf32, #tpu.memory_space<vmem>>, vector<1x8x128xf32>,
      %47 = vector.broadcast %44 : f32 to vector<1x8x128xf32>
      %c0_33 = arith.constant 0 : index
      %c0_34 = arith.constant 0 : index
      %c0_35 = arith.constant 0 : index
      %48 = vector.load %arg6[%c0_33, %c0_34, %c0_35] : memref<1x8x128xf32, #tpu.memory_space<vmem>>, vector<1x8x128xf32>
      tpu.vector_store %arg6[%c0_33, %c0_34, %c0_35], %47 {strides = array<i32>} : memref<1x8x128xf32, #tpu.memory_space<vmem>>, vector<1x8x128xf32>,
    } else {
    }
    return
  }
  func.func @transform_0(%arg0: i32, %arg1: i32) -> (i32, i32) {
    %c1_i32 = arith.constant 1 : i32
    %0 = arith.muli %arg0, %c1_i32 : i32
    %1 = arith.addi %0, %arg1 : i32
    %c0_i32 = arith.constant 0 : i32
    %c0_i32_0 = arith.constant 0 : i32
    return %1, %c0_i32 : i32, i32
  }
  func.func @transform_1(%arg0: i32, %arg1: i32) -> (i32, i32) {
    %c1_i32 = arith.constant 1 : i32
    %0 = arith.muli %arg0, %c1_i32 : i32
    %1 = arith.addi %0, %arg1 : i32
    %c0_i32 = arith.constant 0 : i32
    %c0_i32_0 = arith.constant 0 : i32
    return %1, %c0_i32 : i32, i32
  }
  func.func @transform_2(%arg0: i32, %arg1: i32) -> (i32, i32) {
    %c1_i32 = arith.constant 1 : i32
    %0 = arith.muli %arg0, %c1_i32 : i32
    %1 = arith.addi %0, %arg1 : i32
    %c0_i32 = arith.constant 0 : i32
    %c0_i32_0 = arith.constant 0 : i32
    return %1, %c0_i32 : i32, i32
  }
  func.func @transform_3(%arg0: i32, %arg1: i32) -> (i32, i32, i32) {
    %c0_i32 = arith.constant 0 : i32
    %c0_i32_0 = arith.constant 0 : i32
    %c0_i32_1 = arith.constant 0 : i32
    return %arg0, %c0_i32, %c0_i32_0 : i32, i32, i32
  }
  func.func @transform_4(%arg0: i32, %arg1: i32) -> (i32, i32, i32) {
    %c0_i32 = arith.constant 0 : i32
    %c0_i32_0 = arith.constant 0 : i32
    %c0_i32_1 = arith.constant 0 : i32
    return %arg0, %c0_i32, %c0_i32_0 : i32, i32, i32
  }
}

</mosaic_0001>

<llo_original>
// kernel: smooth_l1_loss.1
$region0: #{smooth_l1_loss.1}
  #allocation0 [shape = 'u32[]', space=smem, size = 0x4, offset = 0x4, fixed_abs, tag = 'smem constant byte address 0x4 - core index']
  #allocation1 [shape = 'u32[144,128]{1,0:T(1,128)}', space=vmem, size = 0x12000, scoped, tag = 'internal scratch']
  #allocation2 [shape = 'f32[8,512]{1,0:T(8,128)}', space=vmem, size = 0x4000, scoped, tag = 'scratch operand']
  #allocation3 [shape = 'f32[8,512]{1,0:T(8,128)}', space=vmem, size = 0x4000, scoped, tag = 'scratch operand']
  %s0 = inlined_call_operand.vmem [shape: f32[16,512], index: 0, kind: input, shape index: {}]
  %s1 = inlined_call_operand.vmem [shape: f32[16,512], index: 1, kind: input, shape index: {}]
  %s2 = inlined_call_operand.vmem [shape: s32[16,512], index: 2, kind: input, shape index: {}]
  %s3 = inlined_call_operand.vmem [shape: f32[2,8,128], index: 3, kind: output, shape index: {0}]
  %s4 = inlined_call_operand.vmem [shape: f32[2,8,128], index: 4, kind: output, shape index: {1}]
  %5 = xla_tuple %s3, %s4
  %s6 = sld [smem:[#allocation0]]
  $region61: #{smooth_l1_loss.1} parent=0
    _
  %s8 = ssub.s32 1, %s6
  %s9 = scalar_select 0, %s8, %s6
  loop: start=0, step=1, limit=4
  $region2: #{smooth_l1_loss.1} parent=0 // loop_pre_header
    _
  $region3: #{smooth_l1_loss.1} parent=0 // loop_header
    %s11 = sphi 0, %s15
    %p12 = scmp.ge.s32.totalorder %s11, 4
    %s18 = sphi 0, %s30
    %s19 = sphi 0, %s26
    %s20 = sphi 0, %s18
    %s21 = sphi 0, %s19
    %s22 = sphi 0, %s20
    %s23 = sphi 0, %s21
    %s35 = sphi 0, %s37
    %s38 = sphi 0, %s35
    %s39 = sphi 0, %s38
    %s55 = sphi 0, %s39
    %s63 = sphi 0, %s65
    %s66 = sphi 0, %s63
    %s67 = sphi 0, %s66
    %s83 = sphi 0, %s67
    %s91 = sphi 0, %s93
    %s94 = sphi 0, %s91
    %s95 = sphi 0, %s94
    %s111 = sphi 0, %s95
    %s117 = sphi 0, %s119
    %s120 = sphi 0, %s117
    %s121 = sphi 0, %s120
    %s137 = sphi 0, %s121
    %s143 = sphi 0, %s145
    %s146 = sphi 0, %s143
    %s147 = sphi 0, %s146
    %s163 = sphi 0, %s147
  $region4: #{smooth_l1_loss.1} parent=0 // loop_header_branch
    %14 = sbr.rel (%p12) target = $region8
  $region5: #{smooth_l1_loss.1} parent=0 // loop_body
    %s16 = ssub.s32 %s11, 1
    %s17 = ssub.s32 %s11, 2
    %s24 = sadd.s32 1, %s19
    %p25 = scmp.ge.s32.totalorder %s24, 1
    %s26 = scalar_select %p25, 0, %s24
    %s27 = sadd.s32 1, %s18
    %s28 = scalar_select %p25, %s27, %s18
    %p29 = scmp.ge.s32.totalorder %s28, 2
    %s30 = scalar_select %p29, 0, %s28
    %s31 = sadd.s32 %s18, %s19
    %s32 = sadd.s32 %s30, %s26
    %s33 = ssub.s32 %s31, %s32
    %p34 = scmp.eq.s32.totalorder %s33, 0
    %s36 = sadd.s32 %s35, 1
    %s37 = scalar_select %p34, %s35, %s36
    %p40 = pneg %p34
    %p41 = scmp.eq.s32.totalorder %s11, 1
    %p42 = por %p40, %p41
    %p43 = scmp.ne.s32.totalorder %s35, %s38
    %p44 = scmp.eq.s32.totalorder %s11, 0
    %p45 = por %p43, %p44
    %p46 = scmp.ne.s32.totalorder %s35, %s38
    %p47 = scmp.eq.s32.totalorder %s16, 1
    %p48 = por %p46, %p47
    %p49 = scmp.ne.s32.totalorder %s38, %s39
    %p50 = scmp.eq.s32.totalorder %s16, 0
    %p51 = por %p49, %p50
    %p52 = scmp.ne.s32.totalorder %s38, %s39
    %p53 = scmp.eq.s32.totalorder %s17, 1
    %p54 = por %p52, %p53
    %p56 = scmp.ne.s32.totalorder %s39, %s55
    %p57 = scmp.eq.s32.totalorder %s17, 0
    %p58 = por %p56, %p57
    %s59 = sadd.s32 %s18, %s19
    %s60 = sadd.s32 %s30, %s26
    %s61 = ssub.s32 %s59, %s60
    %p62 = scmp.eq.s32.totalorder %s61, 0
    %s64 = sadd.s32 %s63, 1
    %s65 = scalar_select %p62, %s63, %s64
    %p68 = pneg %p62
    %p69 = scmp.eq.s32.totalorder %s11, 1
    %p70 = por %p68, %p69
    %p71 = scmp.ne.s32.totalorder %s63, %s66
    %p72 = scmp.eq.s32.totalorder %s11, 0
    %p73 = por %p71, %p72
    %p74 = scmp.ne.s32.totalorder %s63, %s66
    %p75 = scmp.eq.s32.totalorder %s16, 1
    %p76 = por %p74, %p75
    %p77 = scmp.ne.s32.totalorder %s66, %s67
    %p78 = scmp.eq.s32.totalorder %s16, 0
    %p79 = por %p77, %p78
    %p80 = scmp.ne.s32.totalorder %s66, %s67
    %p81 = scmp.eq.s32.totalorder %s17, 1
    %p82 = por %p80, %p81
    %p84 = scmp.ne.s32.totalorder %s67, %s83
    %p85 = scmp.eq.s32.totalorder %s17, 0
    %p86 = por %p84, %p85
    %s87 = sadd.s32 %s18, %s19
    %s88 = sadd.s32 %s30, %s26
    %s89 = ssub.s32 %s87, %s88
    %p90 = scmp.eq.s32.totalorder %s89, 0
    %s92 = sadd.s32 %s91, 1
    %s93 = scalar_select %p90, %s91, %s92
    %p96 = pneg %p90
    %p97 = scmp.eq.s32.totalorder %s11, 1
    %p98 = por %p96, %p97
    %p99 = scmp.ne.s32.totalorder %s91, %s94
    %p100 = scmp.eq.s32.totalorder %s11, 0
    %p101 = por %p99, %p100
    %p102 = scmp.ne.s32.totalorder %s91, %s94
    %p103 = scmp.eq.s32.totalorder %s16, 1
    %p104 = por %p102, %p103
    %p105 = scmp.ne.s32.totalorder %s94, %s95
    %p106 = scmp.eq.s32.totalorder %s16, 0
    %p107 = por %p105, %p106
    %p108 = scmp.ne.s32.totalorder %s94, %s95
    %p109 = scmp.eq.s32.totalorder %s17, 1
    %p110 = por %p108, %p109
    %p112 = scmp.ne.s32.totalorder %s95, %s111
    %p113 = scmp.eq.s32.totalorder %s17, 0
    %p114 = por %p112, %p113
    %s115 = ssub.s32 %s18, %s30
    %p116 = scmp.eq.s32.totalorder %s115, 0
    %s118 = sadd.s32 %s117, 1
    %s119 = scalar_select %p116, %s117, %s118
    %p122 = pneg %p116
    %p123 = scmp.eq.s32.totalorder %s11, 1
    %p124 = por %p122, %p123
    %p125 = scmp.ne.s32.totalorder %s117, %s120
    %p126 = scmp.eq.s32.totalorder %s11, 0
    %p127 = por %p125, %p126
    %p128 = scmp.ne.s32.totalorder %s117, %s120
    %p129 = scmp.eq.s32.totalorder %s16, 1
    %p130 = por %p128, %p129
    %p131 = scmp.ne.s32.totalorder %s120, %s121
    %p132 = scmp.eq.s32.totalorder %s16, 0
    %p133 = por %p131, %p132
    %p134 = scmp.ne.s32.totalorder %s120, %s121
    %p135 = scmp.eq.s32.totalorder %s17, 1
    %p136 = por %p134, %p135
    %p138 = scmp.ne.s32.totalorder %s121, %s137
    %p139 = scmp.eq.s32.totalorder %s17, 0
    %p140 = por %p138, %p139
    %s141 = ssub.s32 %s18, %s30
    %p142 = scmp.eq.s32.totalorder %s141, 0
    %s144 = sadd.s32 %s143, 1
    %s145 = scalar_select %p142, %s143, %s144
    %p148 = pneg %p142
    %p149 = scmp.eq.s32.totalorder %s11, 1
    %p150 = por %p148, %p149
    %p151 = scmp.ne.s32.totalorder %s143, %s146
    %p152 = scmp.eq.s32.totalorder %s11, 0
    %p153 = por %p151, %p152
    %p154 = scmp.ne.s32.totalorder %s143, %s146
    %p155 = scmp.eq.s32.totalorder %s16, 1
    %p156 = por %p154, %p155
    %p157 = scmp.ne.s32.totalorder %s146, %s147
    %p158 = scmp.eq.s32.totalorder %s16, 0
    %p159 = por %p157, %p158
    %p160 = scmp.ne.s32.totalorder %s146, %s147
    %p161 = scmp.eq.s32.totalorder %s17, 1
    %p162 = por %p160, %p161
    %p164 = scmp.ne.s32.totalorder %s147, %s163
    %p165 = scmp.eq.s32.totalorder %s17, 0
    %p166 = por %p164, %p165
    %p167 = scmp.le.s32.totalorder 1, %s11
    %p168 = scmp.lt.s32.totalorder %s11, 3
    %p169 = pnand %p167, %p168
    %p170 = pneg %p169
    // Predicated region
    $region9: #{smooth_l1_loss.1} parent=5 // pred_check
      _
    $region10: #{smooth_l1_loss.1} parent=5 // pred_check_branch
      %172 = sbr.rel (%p169) target = $region12
    $region11: #{smooth_l1_loss.1} parent=5 // pred_region
      %s173 = ssub.s32 %s11, 1
    $region12: #{smooth_l1_loss.1} parent=5 // pred_fallthru
      _
    %p174 = scmp.lt.s32.totalorder %s11, 2
    // Predicated region
    $region13: #{smooth_l1_loss.1} parent=5 // pred_check
      %p175 = pneg %p174
    $region14: #{smooth_l1_loss.1} parent=5 // pred_check_branch
      %177 = sbr.rel (%p175) target = $region16
    $region15: #{smooth_l1_loss.1} parent=5 // pred_region
      // Predicated region
      $region17: #{smooth_l1_loss.1} parent=15 // pred_check
        %p178 = pneg %p45
      $region18: #{smooth_l1_loss.1} parent=15 // pred_check_branch
        %180 = sbr.rel (%p178) target = $region20
      $region19: #{smooth_l1_loss.1} parent=15 // pred_region
        %s181 = sadd.s32 %s18, %s19
        %p182 = scmp.lt.s32.totalorder %s181, 1
        %s183 = scalar_select %p182, %s181, 1
        %s184 = smul.addr %s183, 4
        %s185 = smul.addr %s184, 8
        %s186 = scalar_lea.vmem %s0, %s185
        %s187 = sadd.s32 %s18, %s19
      $region20: #{smooth_l1_loss.1} parent=15 // pred_fallthru
        _
      // Predicated region
      $region21: #{smooth_l1_loss.1} parent=15 // pred_check
        %p188 = pneg %p73
      $region22: #{smooth_l1_loss.1} parent=15 // pred_check_branch
        %190 = sbr.rel (%p188) target = $region24
      $region23: #{smooth_l1_loss.1} parent=15 // pred_region
        %s191 = sadd.s32 %s18, %s19
        %p192 = scmp.lt.s32.totalorder %s191, 1
        %s193 = scalar_select %p192, %s191, 1
        %s194 = smul.addr %s193, 4
        %s195 = smul.addr %s194, 8
        %s196 = scalar_lea.vmem %s1, %s195
        %s197 = sadd.s32 %s18, %s19
      $region24: #{smooth_l1_loss.1} parent=15 // pred_fallthru
        _
      // Predicated region
      $region25: #{smooth_l1_loss.1} parent=15 // pred_check
        %p198 = pneg %p101
      $region26: #{smooth_l1_loss.1} parent=15 // pred_check_branch
        %200 = sbr.rel (%p198) target = $region28
      $region27: #{smooth_l1_loss.1} parent=15 // pred_region
        %s201 = sadd.s32 %s18, %s19
        %p202 = scmp.lt.s32.totalorder %s201, 1
        %s203 = scalar_select %p202, %s201, 1
        %s204 = smul.addr %s203, 4
        %s205 = smul.addr %s204, 8
        %s206 = scalar_lea.vmem %s2, %s205
        %s207 = sadd.s32 %s18, %s19
      $region28: #{smooth_l1_loss.1} parent=15 // pred_fallthru
        _
    $region16: #{smooth_l1_loss.1} parent=5 // pred_fallthru
      _
    %p208 = scmp.le.s32.totalorder 1, %s11
    %p209 = scmp.lt.s32.totalorder %s11, 3
    %p210 = pnand %p208, %p209
    %p211 = pneg %p210
    // Predicated region
    $region29: #{smooth_l1_loss.1} parent=5 // pred_check
      _
    $region30: #{smooth_l1_loss.1} parent=5 // pred_check_branch
      %213 = sbr.rel (%p210) target = $region32
    $region31: #{smooth_l1_loss.1} parent=5 // pred_region
      %s214 = ssub.s32 %s11, 1
      %s215 = sadd.s32 %s20, %s21
      %p216 = scmp.lt.s32.totalorder %s215, 1
      %s217 = scalar_select %p216, %s215, 1
      %s218 = smul.addr %s217, 4
      %s219 = smul.addr %s218, 8
      %s220 = scalar_lea.vmem %s0, %s219
      %p221 = pneg %p51
      %p222 = pneg %p48
      %s223 = sadd.s32 %s20, %s21
      %p224 = scmp.lt.s32.totalorder %s223, 1
      %s225 = scalar_select %p224, %s223, 1
      %s226 = smul.addr %s225, 4
      %s227 = smul.addr %s226, 8
      %s228 = scalar_lea.vmem %s1, %s227
      %p229 = pneg %p79
      %p230 = pneg %p76
      %s231 = sadd.s32 %s20, %s21
      %p232 = scmp.lt.s32.totalorder %s231, 1
      %s233 = scalar_select %p232, %s231, 1
      %s234 = smul.addr %s233, 4
      %s235 = smul.addr %s234, 8
      %s236 = scalar_lea.vmem %s2, %s235
      %p237 = pneg %p107
      %p238 = pneg %p104
      %p239 = pneg %p133
      %p240 = pneg %p130
      %p241 = scmp.lt.s32.totalorder %s20, 1
      %s242 = scalar_select %p241, %s20, 1
      %s243 = smul.addr %s242, 8
      %s244 = scalar_lea.vmem %s3, %s243
      %p245 = pneg %p159
      %p246 = pneg %p156
      %p247 = scmp.lt.s32.totalorder %s20, 1
      %s248 = scalar_select %p247, %s20, 1
      %s249 = smul.addr %s248, 8
      %s250 = scalar_lea.vmem %s4, %s249
      %s251 = sadd.s32 %s20, %s21
      %p252 = scmp.lt.s32.totalorder %s251, 1
      %s253 = scalar_select %p252, %s251, 1
      %s254 = smul.addr %s253, 4
      %s255 = smul.addr %s254, 8
      %s256 = scalar_lea.vmem %s0, %s255
      %s257 = sadd.s32 %s20, %s21
      %s258 = sadd.s32 %s20, %s21
      %p259 = scmp.lt.s32.totalorder %s258, 1
      %s260 = scalar_select %p259, %s258, 1
      %s261 = smul.addr %s260, 4
      %s262 = smul.addr %s261, 8
      %s263 = scalar_lea.vmem %s1, %s262
      %s264 = sadd.s32 %s20, %s21
      %s265 = sadd.s32 %s20, %s21
      %p266 = scmp.lt.s32.totalorder %s265, 1
      %s267 = scalar_select %p266, %s265, 1
      %s268 = smul.addr %s267, 4
      %s269 = smul.addr %s268, 8
      %s270 = scalar_lea.vmem %s2, %s269
      %s271 = sadd.s32 %s20, %s21
      %p272 = scmp.lt.s32.totalorder %s20, 1
      %s273 = scalar_select %p272, %s20, 1
      %s274 = smul.addr %s273, 8
      %s275 = scalar_lea.vmem %s3, %s274
      %p276 = scmp.lt.s32.totalorder %s20, 1
      %s277 = scalar_select %p276, %s20, 1
      %s278 = smul.addr %s277, 8
      %s279 = scalar_lea.vmem %s4, %s278
      %p280 = scmp.eq.s32.totalorder %s21, 0
      // Predicated region
      $region33: #{smooth_l1_loss.1} parent=31 // pred_check
        %p281 = pneg %p280
      $region34: #{smooth_l1_loss.1} parent=31 // pred_check_branch
        %283 = sbr.rel (%p281) target = $region36
      $region35: #{smooth_l1_loss.1} parent=31 // pred_region
        %284 = vst [vmem:[#allocation2] sm:$0xff] 0.0
        %285 = vst [vmem:[#allocation2 + $0x8] sm:$0xff] 0.0
        %286 = vst [vmem:[#allocation2 + $0x10] sm:$0xff] 0.0
        %287 = vst [vmem:[#allocation2 + $0x18] sm:$0xff] 0.0
        %288 = vst [vmem:[#allocation3] sm:$0xff] 0.0
        %289 = vst [vmem:[#allocation3 + $0x8] sm:$0xff] 0.0
        %290 = vst [vmem:[#allocation3 + $0x10] sm:$0xff] 0.0
        %291 = vst [vmem:[#allocation3 + $0x18] sm:$0xff] 0.0
      $region36: #{smooth_l1_loss.1} parent=31 // pred_fallthru
        _
      %v292 = vld [vmem:[%s256] sm:$0xff]
      %v293 = vld [vmem:[%s256 + $0x8] sm:$0xff]
      %v294 = vld [vmem:[%s256 + $0x10] sm:$0xff]
      %v295 = vld [vmem:[%s256 + $0x18] sm:$0xff]
      %v296 = vld [vmem:[%s263] sm:$0xff]
      %v297 = vld [vmem:[%s263 + $0x8] sm:$0xff]
      %v298 = vld [vmem:[%s263 + $0x10] sm:$0xff]
      %v299 = vld [vmem:[%s263 + $0x18] sm:$0xff]
      %v300 = vld [vmem:[%s270] sm:$0xff]
      %v301 = vld [vmem:[%s270 + $0x8] sm:$0xff]
      %v302 = vld [vmem:[%s270 + $0x10] sm:$0xff]
      %v303 = vld [vmem:[%s270 + $0x18] sm:$0xff]
      %vm304 = vcmp.gt.s32.totalorder %v300, 0
      %vm305 = vcmp.gt.s32.totalorder %v301, 0
      %vm306 = vcmp.gt.s32.totalorder %v302, 0
      %vm307 = vcmp.gt.s32.totalorder %v303, 0
      %v308 = vsub.f32 %v292, %v296
      %v309 = vsub.f32 %v293, %v297
      %v310 = vsub.f32 %v294, %v298
      %v311 = vsub.f32 %v295, %v299
      %v312 = vsel %vm304, %v308, 0.0
      %v313 = vsel %vm305, %v309, 0.0
      %v314 = vsel %vm306, %v310, 0.0
      %v315 = vsel %vm307, %v311, 0.0
      %v316 = vand.u32 2147483647, %v312
      %v317 = vand.u32 2147483647, %v313
      %v318 = vand.u32 2147483647, %v314
      %v319 = vand.u32 2147483647, %v315
      %vm320 = vcmp.lt.f32.partialorder %v316, 0.11111111
      %vm321 = vcmp.lt.f32.partialorder %v317, 0.11111111
      %vm322 = vcmp.lt.f32.partialorder %v318, 0.11111111
      %vm323 = vcmp.lt.f32.partialorder %v319, 0.11111111
      %v324 = vmul.f32 %v312, 4.5
      %v325 = vmul.f32 %v313, 4.5
      %v326 = vmul.f32 %v314, 4.5
      %v327 = vmul.f32 %v315, 4.5
      %v328 = vmul.f32 %v324, %v312
      %v329 = vmul.f32 %v325, %v313
      %v330 = vmul.f32 %v326, %v314
      %v331 = vmul.f32 %v327, %v315
      %v332 = vsub.f32 %v316, 0.055555556
      %v333 = vsub.f32 %v317, 0.055555556
      %v334 = vsub.f32 %v318, 0.055555556
      %v335 = vsub.f32 %v319, 0.055555556
      %v336 = vsel %vm320, %v328, %v332
      %v337 = vsel %vm321, %v329, %v333
      %v338 = vsel %vm322, %v330, %v334
      %v339 = vsel %vm323, %v331, %v335
      %v340 = vld [vmem:[#allocation2] sm:$0xff]
      %v341 = vld [vmem:[#allocation2 + $0x8] sm:$0xff]
      %v342 = vld [vmem:[#allocation2 + $0x10] sm:$0xff]
      %v343 = vld [vmem:[#allocation2 + $0x18] sm:$0xff]
      %v344 = vadd.f32 %v340, %v336
      %v345 = vadd.f32 %v341, %v337
      %v346 = vadd.f32 %v342, %v338
      %v347 = vadd.f32 %v343, %v339
      %348 = vst [vmem:[#allocation2] sm:$0xff] %v344
      %349 = vst [vmem:[#allocation2 + $0x8] sm:$0xff] %v345
      %350 = vst [vmem:[#allocation2 + $0x10] sm:$0xff] %v346
      %351 = vst [vmem:[#allocation2 + $0x18] sm:$0xff] %v347
      %v352 = vld [vmem:[#allocation3] sm:$0xff]
      %v353 = vld [vmem:[#allocation3 + $0x8] sm:$0xff]
      %v354 = vld [vmem:[#allocation3 + $0x10] sm:$0xff]
      %v355 = vld [vmem:[#allocation3 + $0x18] sm:$0xff]
      %vm356 = vcmp.ge.s32.totalorder %v300, 0
      %vm357 = vcmp.ge.s32.totalorder %v301, 0
      %vm358 = vcmp.ge.s32.totalorder %v302, 0
      %vm359 = vcmp.ge.s32.totalorder %v303, 0
      %v360 = vsel %vm356, 1.0, 0.0
      %v361 = vsel %vm357, 1.0, 0.0
      %v362 = vsel %vm358, 1.0, 0.0
      %v363 = vsel %vm359, 1.0, 0.0
      %v364 = vadd.f32 %v352, %v360
      %v365 = vadd.f32 %v353, %v361
      %v366 = vadd.f32 %v354, %v362
      %v367 = vadd.f32 %v355, %v363
      %368 = vst [vmem:[#allocation3] sm:$0xff] %v364
      %369 = vst [vmem:[#allocation3 + $0x8] sm:$0xff] %v365
      %370 = vst [vmem:[#allocation3 + $0x10] sm:$0xff] %v366
      %371 = vst [vmem:[#allocation3 + $0x18] sm:$0xff] %v367
      // Predicated region
      $region37: #{smooth_l1_loss.1} parent=31 // pred_check
        %p372 = pneg %p280
      $region38: #{smooth_l1_loss.1} parent=31 // pred_check_branch
        %374 = sbr.rel (%p372) target = $region40
      $region39: #{smooth_l1_loss.1} parent=31 // pred_region
        %v375 = vld [vmem:[#allocation2] sm:$0xff]
        %v376 = vld [vmem:[#allocation2 + $0x8] sm:$0xff]
        %v377 = vld [vmem:[#allocation2 + $0x10] sm:$0xff]
        %v378 = vld [vmem:[#allocation2 + $0x18] sm:$0xff]
        %v379 = vadd.f32 %v375, %v376
        %v380 = vadd.f32 %v379, %v377
        %v381 = vadd.f32 %v380, %v378
        %382 = vadd.xlane.f32.xlu0 %v381
        %v383 = vpop.xlane.xlu0 %382
        %v384 = vrot.slane %v383, 4
        %v385 = vadd.f32 %v383, %v384
        %v386 = vrot.slane %v385, 2
        %v387 = vadd.f32 %v385, %v386
        %v388 = vrot.slane %v387, 1
        %v389 = vadd.f32 %v387, %v388
        %s390 = vtos %v389
        %v391 = vld [vmem:[#allocation3] sm:$0xff]
        %v392 = vld [vmem:[#allocation3 + $0x8] sm:$0xff]
        %v393 = vld [vmem:[#allocation3 + $0x10] sm:$0xff]
        %v394 = vld [vmem:[#allocation3 + $0x18] sm:$0xff]
        %v395 = vadd.f32 %v391, %v392
        %v396 = vadd.f32 %v395, %v393
        %v397 = vadd.f32 %v396, %v394
        %398 = vadd.xlane.f32.xlu0 %v397
        %v399 = vpop.xlane.xlu0 %398
        %v400 = vrot.slane %v399, 4
        %v401 = vadd.f32 %v399, %v400
        %v402 = vrot.slane %v401, 2
        %v403 = vadd.f32 %v401, %v402
        %v404 = vrot.slane %v403, 1
        %v405 = vadd.f32 %v403, %v404
        %s406 = vtos %v405
        %s407 = smul.f32 %s406, 0.25
        %v408 = vstv %s390
        %409 = vst [vmem:[%s275] sm:$0xff] %v408
        %v410 = vstv %s407
        %411 = vst [vmem:[%s279] sm:$0xff] %v410
      $region40: #{smooth_l1_loss.1} parent=31 // pred_fallthru
        _
      %p412 = scmp.lt.s32.totalorder %s20, 1
      %s413 = scalar_select %p412, %s20, 1
      %s414 = smul.addr %s413, 8
      %s415 = scalar_lea.vmem %s3, %s414
      %p416 = scmp.lt.s32.totalorder %s20, 1
      %s417 = scalar_select %p416, %s20, 1
      %s418 = smul.addr %s417, 8
      %s419 = scalar_lea.vmem %s4, %s418
      // Predicated region
      $region41: #{smooth_l1_loss.1} parent=31 // pred_check
        %p420 = pneg %p130
      $region42: #{smooth_l1_loss.1} parent=31 // pred_check_branch
        %422 = sbr.rel (%p420) target = $region44
      $region43: #{smooth_l1_loss.1} parent=31 // pred_region
        _
      $region44: #{smooth_l1_loss.1} parent=31 // pred_fallthru
        _
      // Predicated region
      $region45: #{smooth_l1_loss.1} parent=31 // pred_check
        %p423 = pneg %p156
      $region46: #{smooth_l1_loss.1} parent=31 // pred_check_branch
        %425 = sbr.rel (%p423) target = $region48
      $region47: #{smooth_l1_loss.1} parent=31 // pred_region
        _
      $region48: #{smooth_l1_loss.1} parent=31 // pred_fallthru
        _
    $region32: #{smooth_l1_loss.1} parent=5 // pred_fallthru
      _
    %p426 = scmp.le.s32.totalorder 2, %s11
    // Predicated region
    $region49: #{smooth_l1_loss.1} parent=5 // pred_check
      %p427 = pneg %p426
    $region50: #{smooth_l1_loss.1} parent=5 // pred_check_branch
      %429 = sbr.rel (%p427) target = $region52
    $region51: #{smooth_l1_loss.1} parent=5 // pred_region
      %s430 = ssub.s32 %s11, 2
      // Predicated region
      $region53: #{smooth_l1_loss.1} parent=51 // pred_check
        %p431 = pneg %p136
      $region54: #{smooth_l1_loss.1} parent=51 // pred_check_branch
        %433 = sbr.rel (%p431) target = $region56
      $region55: #{smooth_l1_loss.1} parent=51 // pred_region
        %p434 = scmp.lt.s32.totalorder %s22, 1
        %s435 = scalar_select %p434, %s22, 1
        %s436 = smul.addr %s435, 8
        %s437 = scalar_lea.vmem %s3, %s436
      $region56: #{smooth_l1_loss.1} parent=51 // pred_fallthru
        _
      // Predicated region
      $region57: #{smooth_l1_loss.1} parent=51 // pred_check
        %p438 = pneg %p162
      $region58: #{smooth_l1_loss.1} parent=51 // pred_check_branch
        %440 = sbr.rel (%p438) target = $region60
      $region59: #{smooth_l1_loss.1} parent=51 // pred_region
        %p441 = scmp.lt.s32.totalorder %s22, 1
        %s442 = scalar_select %p441, %s22, 1
        %s443 = smul.addr %s442, 8
        %s444 = scalar_lea.vmem %s4, %s443
      $region60: #{smooth_l1_loss.1} parent=51 // pred_fallthru
        _
    $region52: #{smooth_l1_loss.1} parent=5 // pred_fallthru
      _
  $region6: #{smooth_l1_loss.1} parent=0 // loop_footer
    %s15 = sadd.s32 1, %s11
  $region7: #{smooth_l1_loss.1} parent=0 // loop_footer_branch
    %10 = sbr.rel target = $region3
  $region8: #{smooth_l1_loss.1} parent=0 // loop_exit
    _

</llo_original>
